<compile_context>
chip_gen: v7x
topology: tpu7x:2x2x1
jax: 0.10.0
libtpu: 0.0.40
codegen_flags: <defaults>
</compile_context>

<pallas_src>
import functools

import jax
import jax.numpy as jnp
from jax.experimental import pallas as pl
from jax.experimental.pallas import tpu as pltpu


def _round_up(x: int, m: int) -> int:
    return (x + m - 1) // m * m


def canine_output_kernel(x_ref, res_ref, w_ref, b_ref, gamma_ref, beta_ref,
                         o_ref, *, eps: float, inv_h: float):
    # x_ref:      (tm, I)  intermediate activations tile (native dtype)
    # res_ref:    (tm, H)  residual (input_tensor) tile
    # w_ref:      (I, H)   dense weight, pre-transposed to (in, out)
    # b_ref:      (1, H)   dense bias
    # gamma/beta: (1, H)   LayerNorm affine params
    # o_ref:      (tm, H)  output tile

    # Dense: feed native-dtype operands straight to the MXU (bf16 fast path
    # when inputs are bf16); accumulate in f32.
    h = jnp.dot(x_ref[...], w_ref[...], preferred_element_type=jnp.float32)
    h = h + b_ref[...].astype(jnp.float32)

    # Dropout is identity at inference time.
    # TODO(synk): training-mode dropout would use pltpu.prng_seed / prng_random_bits.

    # Residual add in f32.
    h = h + res_ref[...].astype(jnp.float32)

    # LayerNorm over the hidden (last) dim, f32 math.
    mean = jnp.sum(h, axis=-1, keepdims=True) * inv_h       # XLU reduce + const mul
    centered = h - mean
    var = jnp.sum(centered * centered, axis=-1, keepdims=True) * inv_h
    inv = jax.lax.rsqrt(var + eps)                           # EUP slot
    out = (centered * inv * gamma_ref[...].astype(jnp.float32)
           + beta_ref[...].astype(jnp.float32))

    o_ref[...] = out.astype(o_ref.dtype)


def canine_output(hidden_states, input_tensor, w, b, gamma, beta,
                  *, eps=1e-12, tm=256):
    """CanineOutput forward pass.

    hidden_states: [B, S, I]   (input to the dense layer)
    input_tensor:  [B, S, H]   (residual)
    w:             [I, H]      (nn.Linear weight pre-transposed to in x out)
    b, gamma, beta: [H]
    Returns:       [B, S, H]

    tm: row tile.  Use a multiple of 128 (v5e) / 256 (v6e, v7x); it is rounded
    to a multiple of 8 and clamped for small problems.  Rows are zero-padded
    to a multiple of tm, so arbitrary batch*seq is supported.
    """
    B, S, I = hidden_states.shape
    H = input_tensor.shape[-1]
    M = B * S

    # Row tiling (sublane dim must be a multiple of 8).
    tm = max(8, _round_up(int(tm), 8))
    tm = min(tm, _round_up(M, 8))
    M_pad = _round_up(M, tm)

    x2d = hidden_states.reshape(M, I)
    r2d = input_tensor.reshape(M, H)
    if M_pad != M:
        pad = M_pad - M
        x2d = jnp.pad(x2d, ((0, pad), (0, 0)))
        r2d = jnp.pad(r2d, ((0, pad), (0, 0)))

    b2d = b.reshape(1, H)
    g2d = gamma.reshape(1, H)
    beta2d = beta.reshape(1, H)

    grid = (M_pad // tm,)

    kernel = functools.partial(canine_output_kernel,
                               eps=float(eps), inv_h=1.0 / float(H))

    # Advisory cost estimate so XLA schedules surrounding ops around this call.
    bytes_accessed = (x2d.size * x2d.dtype.itemsize
                      + r2d.size * r2d.dtype.itemsize
                      + w.size * w.dtype.itemsize
                      + M_pad * H * hidden_states.dtype.itemsize)
    cost = pl.CostEstimate(flops=2 * M_pad * I * H,
                           transcendentals=0,
                           bytes_accessed=bytes_accessed)

    out2d = pl.pallas_call(
        kernel,
        out_shape=jax.ShapeDtypeStruct((M_pad, H), hidden_states.dtype),
        grid_spec=pltpu.PrefetchScalarGridSpec(
            num_scalar_prefetch=0,
            grid=grid,
            in_specs=[
                pl.BlockSpec((tm, I), lambda i: (i, 0)),  # activations tile
                pl.BlockSpec((tm, H), lambda i: (i, 0)),  # residual tile
                # Constant-index blocks: DMA'd once for the whole grid.
                pl.BlockSpec((I, H), lambda i: (0, 0)),   # dense weight (full)
                pl.BlockSpec((1, H), lambda i: (0, 0)),   # dense bias
                pl.BlockSpec((1, H), lambda i: (0, 0)),   # LN gamma
                pl.BlockSpec((1, H), lambda i: (0, 0)),   # LN beta
            ],
            out_specs=pl.BlockSpec((tm, H), lambda i: (i, 0)),
        ),
        compiler_params=pltpu.CompilerParams(
            # Row tiles are independent -> megacore shards them on v7x.
            dimension_semantics=("parallel",),
            # Explicit budget: safe on v5e/v6e (128 MiB) and v7x (64 MiB).
            vmem_limit_bytes=48 * 1024 * 1024,
        ),
        cost_estimate=cost,
    )(x2d, r2d, w, b2d, g2d, beta2d)

    return out2d[:M].reshape(B, S, H)


def reference(hidden_states, input_tensor, w, b, gamma, beta, eps=1e-12):
    h = jnp.einsum("bsi,ih->bsh", hidden_states.astype(jnp.float32),
                   w.astype(jnp.float32)) + b.astype(jnp.float32)
    h = h + input_tensor.astype(jnp.float32)
    mean = jnp.mean(h, axis=-1, keepdims=True)
    var = jnp.mean((h - mean) ** 2, axis=-1, keepdims=True)
    return ((h - mean) * jax.lax.rsqrt(var + eps)) * gamma + beta


if __name__ == "__main__":
    # Small config consistent with the module: intermediate_size=64, hidden=32.
    eps = 1e-12
    B, S, I, H = 2, 8, 64, 32

    key = jax.random.PRNGKey(0)
    k1, k2, k3, k4 = jax.random.split(key, 4)

    hidden_states = jax.random.normal(k1, (B, S, I), dtype=jnp.float32)
    input_tensor = jax.random.normal(k2, (B, S, H), dtype=jnp.float32)

    # nn.Linear stores weight as (out, in); we keep it pre-transposed (in, out).
    w = jax.random.normal(k3, (I, H), dtype=jnp.float32) * 0.02
    b = jax.random.normal(k4, (H,), dtype=jnp.float32) * 0.02
    gamma = jnp.ones((H,), dtype=jnp.float32)
    beta = jnp.zeros((H,), dtype=jnp.float32)

    out = canine_output(hidden_states, input_tensor, w, b, gamma, beta, eps=eps)
    out = jax.block_until_ready(out)
    ref = reference(hidden_states, input_tensor, w, b, gamma, beta, eps=eps)
    assert out.shape == (B, S, H)
    assert jnp.allclose(out, ref, atol=1e-5, rtol=1e-5), "mismatch vs reference"

    # Second config where batch*seq is NOT a multiple of the row tile, to
    # exercise the zero-padding / ragged-rows path.
    B2, S2 = 3, 5
    hs2 = jax.random.normal(k1, (B2, S2, I), dtype=jnp.float32)
    res2 = jax.random.normal(k2, (B2, S2, H), dtype=jnp.float32)
    out2 = canine_output(hs2, res2, w, b, gamma, beta, eps=eps)
    out2 = jax.block_until_ready(out2)
    ref2 = reference(hs2, res2, w, b, gamma, beta, eps=eps)
    assert out2.shape == (B2, S2, H)
    assert jnp.allclose(out2, ref2, atol=1e-5, rtol=1e-5), "mismatch (padded rows)"

    print("KERNEL_OK")
</pallas_src>

<mosaic_0001>
module attributes {stable_mosaic.version = 11 : i64} {
  func.func @canine_output_kernel(%arg0: i32, %arg1: memref<16x64xf32, #tpu.memory_space<vmem>>, %arg2: memref<16x32xf32, #tpu.memory_space<vmem>>, %arg3: memref<64x32xf32, #tpu.memory_space<vmem>>, %arg4: memref<1x32xf32, #tpu.memory_space<vmem>>, %arg5: memref<1x32xf32, #tpu.memory_space<vmem>>, %arg6: memref<1x32xf32, #tpu.memory_space<vmem>>, %arg7: memref<16x32xf32, #tpu.memory_space<vmem>>) attributes {dimension_semantics = [#tpu.dimension_semantics<parallel>], iteration_bounds = array<i64: 1>, scalar_prefetch = 0 : i64, scratch_operands = 0 : i64, tpu.core_type = #tpu.core_type<tc>, window_params = [{transform_indices = @transform_0, window_bounds = array<i64: 16, 64>}, {transform_indices = @transform_1, window_bounds = array<i64: 16, 32>}, {pipeline_mode = #tpu.pipeline_mode<synchronous>, transform_indices = @transform_2, window_bounds = array<i64: 64, 32>}, {pipeline_mode = #tpu.pipeline_mode<synchronous>, transform_indices = @transform_3, window_bounds = array<i64: 1, 32>}, {pipeline_mode = #tpu.pipeline_mode<synchronous>, transform_indices = @transform_4, window_bounds = array<i64: 1, 32>}, {pipeline_mode = #tpu.pipeline_mode<synchronous>, transform_indices = @transform_5, window_bounds = array<i64: 1, 32>}, {transform_indices = @transform_6, window_bounds = array<i64: 16, 32>}]} {
    %c0 = arith.constant 0 : index
    %c0_0 = arith.constant 0 : index
    %0 = vector.load %arg1[%c0, %c0_0] : memref<16x64xf32, #tpu.memory_space<vmem>>, vector<16x64xf32>
    %c0_1 = arith.constant 0 : index
    %c0_2 = arith.constant 0 : index
    %1 = vector.load %arg3[%c0_1, %c0_2] : memref<64x32xf32, #tpu.memory_space<vmem>>, vector<64x32xf32>
    %cst = arith.constant dense<0.000000e+00> : vector<16x32xf32>
    %2 = tpu.matmul %0, %1, %cst {dimension_numbers = #tpu.dot_dimension_numbers<[1], [0], [0], [1], [0, 0, 1, 1], [], []>} : vector<16x64xf32>, vector<64x32xf32>, vector<16x32xf32> -> vector<16x32xf32>
    %c0_3 = arith.constant 0 : index
    %c0_4 = arith.constant 0 : index
    %3 = vector.load %arg4[%c0_3, %c0_4] : memref<1x32xf32, #tpu.memory_space<vmem>>, vector<1x32xf32>
    %4 = vector.broadcast %3 : vector<1x32xf32> to vector<16x32xf32>
    %5 = arith.addf %2, %4 : vector<16x32xf32>
    %c0_5 = arith.constant 0 : index
    %c0_6 = arith.constant 0 : index
    %6 = vector.load %arg2[%c0_5, %c0_6] : memref<16x32xf32, #tpu.memory_space<vmem>>, vector<16x32xf32>
    %7 = arith.addf %5, %6 : vector<16x32xf32>
    %cst_7 = arith.constant dense<0.000000e+00> : vector<16xf32>
    %8 = vector.multi_reduction <add>, %7, %cst_7 [1] : vector<16x32xf32> to vector<16xf32>
    %9 = vector.shape_cast %8 : vector<16xf32> to vector<16x1xf32>
    %cst_8 = arith.constant 3.125000e-02 : f32
    %10 = vector.broadcast %cst_8 : f32 to vector<16x1xf32>
    %11 = arith.mulf %9, %10 : vector<16x1xf32>
    %12 = vector.broadcast %11 : vector<16x1xf32> to vector<16x32xf32>
    %13 = arith.subf %7, %12 : vector<16x32xf32>
    %14 = arith.mulf %13, %13 : vector<16x32xf32>
    %cst_9 = arith.constant dense<0.000000e+00> : vector<16xf32>
    %15 = vector.multi_reduction <add>, %14, %cst_9 [1] : vector<16x32xf32> to vector<16xf32>
    %16 = vector.shape_cast %15 : vector<16xf32> to vector<16x1xf32>
    %cst_10 = arith.constant 3.125000e-02 : f32
    %17 = vector.broadcast %cst_10 : f32 to vector<16x1xf32>
    %18 = arith.mulf %16, %17 : vector<16x1xf32>
    %cst_11 = arith.constant 9.99999996E-13 : f32
    %19 = vector.broadcast %cst_11 : f32 to vector<16x1xf32>
    %20 = arith.addf %18, %19 : vector<16x1xf32>
    %21 = math.rsqrt %20 : vector<16x1xf32>
    %22 = vector.broadcast %21 : vector<16x1xf32> to vector<16x32xf32>
    %23 = arith.mulf %13, %22 : vector<16x32xf32>
    %c0_12 = arith.constant 0 : index
    %c0_13 = arith.constant 0 : index
    %24 = vector.load %arg5[%c0_12, %c0_13] : memref<1x32xf32, #tpu.memory_space<vmem>>, vector<1x32xf32>
    %25 = vector.broadcast %24 : vector<1x32xf32> to vector<16x32xf32>
    %26 = arith.mulf %23, %25 : vector<16x32xf32>
    %c0_14 = arith.constant 0 : index
    %c0_15 = arith.constant 0 : index
    %27 = vector.load %arg6[%c0_14, %c0_15] : memref<1x32xf32, #tpu.memory_space<vmem>>, vector<1x32xf32>
    %28 = vector.broadcast %27 : vector<1x32xf32> to vector<16x32xf32>
    %29 = arith.addf %26, %28 : vector<16x32xf32>
    %c0_16 = arith.constant 0 : index
    %c0_17 = arith.constant 0 : index
    %30 = vector.load %arg7[%c0_16, %c0_17] : memref<16x32xf32, #tpu.memory_space<vmem>>, vector<16x32xf32>
    tpu.vector_store %arg7[%c0_16, %c0_17], %29 {strides = array<i32>} : memref<16x32xf32, #tpu.memory_space<vmem>>, vector<16x32xf32>,
    return
  }
  func.func @transform_0(%arg0: i32) -> (i32, i32) {
    %c0_i32 = arith.constant 0 : i32
    %c0_i32_0 = arith.constant 0 : i32
    return %arg0, %c0_i32 : i32, i32
  }
  func.func @transform_1(%arg0: i32) -> (i32, i32) {
    %c0_i32 = arith.constant 0 : i32
    %c0_i32_0 = arith.constant 0 : i32
    return %arg0, %c0_i32 : i32, i32
  }
  func.func @transform_2(%arg0: i32) -> (i32, i32) {
    %c0_i32 = arith.constant 0 : i32
    %c0_i32_0 = arith.constant 0 : i32
    %c0_i32_1 = arith.constant 0 : i32
    return %c0_i32, %c0_i32_0 : i32, i32
  }
  func.func @transform_3(%arg0: i32) -> (i32, i32) {
    %c0_i32 = arith.constant 0 : i32
    %c0_i32_0 = arith.constant 0 : i32
    %c0_i32_1 = arith.constant 0 : i32
    return %c0_i32, %c0_i32_0 : i32, i32
  }
  func.func @transform_4(%arg0: i32) -> (i32, i32) {
    %c0_i32 = arith.constant 0 : i32
    %c0_i32_0 = arith.constant 0 : i32
    %c0_i32_1 = arith.constant 0 : i32
    return %c0_i32, %c0_i32_0 : i32, i32
  }
  func.func @transform_5(%arg0: i32) -> (i32, i32) {
    %c0_i32 = arith.constant 0 : i32
    %c0_i32_0 = arith.constant 0 : i32
    %c0_i32_1 = arith.constant 0 : i32
    return %c0_i32, %c0_i32_0 : i32, i32
  }
  func.func @transform_6(%arg0: i32) -> (i32, i32) {
    %c0_i32 = arith.constant 0 : i32
    %c0_i32_0 = arith.constant 0 : i32
    return %arg0, %c0_i32 : i32, i32
  }
}

</mosaic_0001>

<llo_original>
// kernel: tpu_custom_call.1
$region0: #{tpu_custom_call.1}
  #allocation0 [shape = 'u32[]', space=smem, size = 0x4, offset = 0x4, fixed_abs, tag = 'smem constant byte address 0x4 - core index']
  #allocation1 [shape = 'u32[144,128]{1,0:T(1,128)}', space=vmem, size = 0x12000, scoped, tag = 'internal scratch']
  %s0 = inlined_call_operand.vmem [shape: f32[16,64], index: 0, kind: input, shape index: {}]
  %s1 = inlined_call_operand.vmem [shape: f32[16,32], index: 1, kind: input, shape index: {}]
  %s2 = inlined_call_operand.vmem [shape: f32[64,32], index: 2, kind: input, shape index: {}]
  %s3 = inlined_call_operand.vmem [shape: f32[1,32], index: 3, kind: input, shape index: {}]
  %s4 = inlined_call_operand.vmem [shape: f32[1,32], index: 4, kind: input, shape index: {}]
  %s5 = inlined_call_operand.vmem [shape: f32[1,32], index: 5, kind: input, shape index: {}]
  %s6 = inlined_call_operand.hbm [shape: f32[16,32], index: 6, kind: output, shape index: {}]
  %s7 = sld [smem:[#allocation0]]
  $region34: #{tpu_custom_call.1} parent=0
    _
  %s9 = ssub.s32 1, %s7
  %s10 = scalar_select 0, %s9, %s7
  $region1: #{tpu_custom_call.1} parent=0
    #allocation2 [shape = 'u8[8192]{0}', space=vmem, size = 0x2000, scoped, tag = 'output window, operand 0, single buffered']
    #allocation3 [shape = 's32[1]{0}', space=sflag, size = 0x4, scoped, tag = 'scoped memory for tpu_custom_call.1']
    %11 = vsyncpa [#allocation3], 0
    // Predicated region
    $region2: #{tpu_custom_call.1} parent=1 // pred_check
      _
    $region3: #{tpu_custom_call.1} parent=1 // pred_check_branch
      %13 = sbr.rel (0) target = $region5
    $region4: #{tpu_custom_call.1} parent=1 // pred_region
      _
    $region5: #{tpu_custom_call.1} parent=1 // pred_fallthru
      _
    // Predicated region
    $region6: #{tpu_custom_call.1} parent=1 // pred_check
      _
    $region7: #{tpu_custom_call.1} parent=1 // pred_check_branch
      %15 = sbr.rel (0) target = $region9
    $region8: #{tpu_custom_call.1} parent=1 // pred_region
      _
    $region9: #{tpu_custom_call.1} parent=1 // pred_fallthru
      _
    // Predicated region
    $region10: #{tpu_custom_call.1} parent=1 // pred_check
      _
    $region11: #{tpu_custom_call.1} parent=1 // pred_check_branch
      %17 = sbr.rel (0) target = $region13
    $region12: #{tpu_custom_call.1} parent=1 // pred_region
      _
    $region13: #{tpu_custom_call.1} parent=1 // pred_fallthru
      _
    // Predicated region
    $region14: #{tpu_custom_call.1} parent=1 // pred_check
      _
    $region15: #{tpu_custom_call.1} parent=1 // pred_check_branch
      %19 = sbr.rel (0) target = $region17
    $region16: #{tpu_custom_call.1} parent=1 // pred_region
      _
    $region17: #{tpu_custom_call.1} parent=1 // pred_fallthru
      _
    // Predicated region
    $region18: #{tpu_custom_call.1} parent=1 // pred_check
      _
    $region19: #{tpu_custom_call.1} parent=1 // pred_check_branch
      %21 = sbr.rel (0) target = $region21
    $region20: #{tpu_custom_call.1} parent=1 // pred_region
      _
    $region21: #{tpu_custom_call.1} parent=1 // pred_fallthru
      _
    // Predicated region
    $region22: #{tpu_custom_call.1} parent=1 // pred_check
      _
    $region23: #{tpu_custom_call.1} parent=1 // pred_check_branch
      %23 = sbr.rel (0) target = $region25
    $region24: #{tpu_custom_call.1} parent=1 // pred_region
      _
    $region25: #{tpu_custom_call.1} parent=1 // pred_fallthru
      _
    %v24 = vld [vmem:[%s0] sm:$0xff]
    %v25 = vld [vmem:[%s0 + $0x8] sm:$0xff]
    %v26 = vld [vmem:[%s2] sm:$0xff]
    %v27 = vld [vmem:[%s2 + $0x8] sm:$0xff]
    %v28 = vld [vmem:[%s2 + $0x10] sm:$0xff]
    %v29 = vld [vmem:[%s2 + $0x18] sm:$0xff]
    %v30 = vld [vmem:[%s2 + $0x20] sm:$0xff]
    %v31 = vld [vmem:[%s2 + $0x28] sm:$0xff]
    %v32 = vld [vmem:[%s2 + $0x30] sm:$0xff]
    %v33 = vld [vmem:[%s2 + $0x38] sm:$0xff]
    %v34 = vld [vmem:[%s3] sm:$0x1]
    %v36 = vlaneseq
    %v37 = vshrl.u32 %v36, 7
    %v38 = vsub.s32 0, %v37
    %v39 = vrot.slane %v34, %v38
    %vm41 = vcmask 523264
    %v43 = vsel %vm41, %v24, 0
    %v46 = vsel %vm41, %v25, 0
    %48 = vmatprep.subr.mxu0 0.0
    %49 = vmatpush1.msra.mxu0 %v26
    %50 = vmatprep.subr.mxu0 0.0
    %51 = vmatpush1.msra.mxu0 %v27
    %52 = vmatprep.subr.mxu0 0.0
    %53 = vmatpush1.msra.mxu0 %v28
    %54 = vmatprep.subr.mxu0 0.0
    %55 = vmatpush1.msra.mxu0 %v29
    %56 = vmatprep.subr.mxu0 0.0
    %57 = vmatpush1.msra.mxu0 %v30
    %58 = vmatprep.subr.mxu0 0.0
    %59 = vmatpush1.msra.mxu0 %v31
    %60 = vmatprep.subr.mxu0 0.0
    %61 = vmatpush1.msra.mxu0 %v32
    %62 = vmatprep.subr.mxu0 0.0
    %63 = vmatpush1.msra.mxu0 %v33
    %64 = vmatprep.subr.mxu0 0.0
    %65 = vmatpush1.msra.mxu0 0.0
    %66 = vmatprep.subr.mxu0 0.0
    %67 = vmatpush1.msra.mxu0 0.0
    %68 = vmatprep.subr.mxu0 0.0
    %69 = vmatpush1.msra.mxu0 0.0
    %70 = vmatprep.subr.mxu0 0.0
    %71 = vmatpush1.msra.mxu0 0.0
    %72 = vmatprep.subr.mxu0 0.0
    %73 = vmatpush1.msra.mxu0 0.0
    %74 = vmatprep.subr.mxu0 0.0
    %75 = vmatpush1.msra.mxu0 0.0
    %76 = vmatprep.subr.mxu0 0.0
    %77 = vmatpush1.msra.mxu0 0.0
    %78 = vmatprep.subr.mxu0 0.0
    %79 = vmatpush1.msra.mxu0 0.0
    %80 = vmatprep.subr.mxu0 0.0
    %81 = vmatpush1.msra.mxu0 0.0
    %82 = vmatprep.subr.mxu0 0.0
    %83 = vmatpush1.msra.mxu0 0.0
    %84 = vmatprep.subr.mxu0 0.0
    %85 = vmatpush1.msra.mxu0 0.0
    %86 = vmatprep.subr.mxu0 0.0
    %87 = vmatpush1.msra.mxu0 0.0
    %88 = vmatprep.subr.mxu0 0.0
    %89 = vmatpush1.msra.mxu0 0.0
    %90 = vmatprep.subr.mxu0 0.0
    %91 = vmatpush1.msra.mxu0 0.0
    %92 = vmatprep.subr.mxu0 0.0
    %93 = vmatpush1.msra.mxu0 0.0
    %94 = vmatprep.subr.mxu0 0.0
    %95 = vmatpush1.msra.mxu0 0.0
    %96 = vmatprep.subr.mxu0 0.0
    %97 = vmatpush1.msra.mxu0 0.0
    %98 = vmatprep.subr.mxu0 0.0
    %99 = vmatpush1.msra.mxu0 0.0
    %100 = vmatprep.subr.mxu0 0.0
    %101 = vmatpush1.msra.mxu0 0.0
    %102 = vmatprep.subr.mxu0 0.0
    %103 = vmatpush1.msra.mxu0 0.0
    %104 = vmatprep.subr.mxu0 0.0
    %105 = vmatpush1.msra.mxu0 0.0
    %106 = vmatprep.subr.mxu0 0.0
    %107 = vmatpush1.msra.mxu0 0.0
    %108 = vmatprep.subr.mxu0 0.0
    %109 = vmatpush1.msra.mxu0 0.0
    %110 = vmatprep.subr.mxu0 0.0
    %111 = vmatpush1.msra.mxu0 0.0
    %112 = vmatprep.mubr.f32.mxu0 0.0
    %113 = vmatmul.mubr.f32.gmra.mrb[0].mxu0 %v43
    %v114 = vpop.f32.mrb[0].mxu0
    %v115 = vadd.f32 %v39, %v114
    %v116 = vpop.f32.mrb[0].mxu0
    %117 = vmatprep.mubr.f32.mxu0 0.0
    %118 = vmatmul.mubr.f32.gmra.mrb[0].mxu0 %v46
    %v119 = vpop.f32.mrb[0].mxu0
    %v120 = vadd.f32 %v39, %v119
    %v121 = vpop.f32.mrb[0].mxu0
    %122 = vdwg.mxu0
    %v123 = vld [vmem:[%s1] sm:$0xff]
    %v124 = vld [vmem:[%s1 + $0x8] sm:$0xff]
    %v125 = vadd.f32 %v115, %v123
    %v126 = vadd.f32 %v120, %v124
    %vm127 = vcmask 261120
    %v128 = vsel %vm127, %v125, 0.0
    %129 = vadd.xlane.f32.xlu0 %v128
    %v130 = vpop.xlane.xlu0 %129
    %v131 = vsel %vm127, %v126, 0.0
    %132 = vadd.xlane.f32.xlu0 %v131
    %v133 = vpop.xlane.xlu0 %132
    %v134 = vmul.f32 %v130, 0.03125
    %v135 = vmul.f32 %v133, 0.03125
    %v136 = vsub.f32 %v125, %v134
    %v137 = vsub.f32 %v126, %v135
    %v138 = vmul.f32 %v136, %v136
    %v139 = vmul.f32 %v137, %v137
    %v140 = vsel %vm127, %v138, 0.0
    %141 = vadd.xlane.f32.xlu0 %v140
    %v142 = vpop.xlane.xlu0 %141
    %v143 = vsel %vm127, %v139, 0.0
    %144 = vadd.xlane.f32.xlu0 %v143
    %v145 = vpop.xlane.xlu0 %144
    %v146 = vmul.f32 %v142, 0.03125
    %v147 = vmul.f32 %v145, 0.03125
    %v148 = vadd.f32 %v146, 1e-12
    %v149 = vadd.f32 %v147, 1e-12
    %v150 = vrsqrt.pop %v148
    %v151 = vrsqrt.pop %v149
    %v152 = vmul.f32 %v136, %v150
    %v153 = vmul.f32 %v137, %v151
    %v154 = vld [vmem:[%s4] sm:$0x1]
    %v156 = vlaneseq
    %v157 = vshrl.u32 %v156, 7
    %v158 = vsub.s32 0, %v157
    %v159 = vrot.slane %v154, %v158
    %v161 = vmul.f32 %v152, %v159
    %v162 = vmul.f32 %v153, %v159
    %v163 = vld [vmem:[%s5] sm:$0x1]
    %v165 = vlaneseq
    %v166 = vshrl.u32 %v165, 7
    %v167 = vsub.s32 0, %v166
    %v168 = vrot.slane %v163, %v167
    %v170 = vadd.f32 %v161, %v168
    %v171 = vadd.f32 %v162, %v168
    %172 = vst.msk [vmem:[#allocation2] sm:$0xff] %vm127, %v170
    %173 = vst.msk [vmem:[#allocation2 + $0x8] sm:$0xff] %vm127, %v171
    // Predicated region
    $region26: #{tpu_custom_call.1} parent=1 // pred_check
      _
    $region27: #{tpu_custom_call.1} parent=1 // pred_check_branch
      %175 = sbr.rel (0) target = $region29
    $region28: #{tpu_custom_call.1} parent=1 // pred_region
      %s177 = ssub.s32 256, 256
      %178 = vsyncadd [#allocation3], %s177
      %s179 = sshll.u32 [#allocation2], 4
      %s180 = int_to_ptr.vmem [resolvable:$true] %s179
      %185 = dma.vmem_to_hbm [thread:$0]  %s180, 256, %s6, [#allocation3], 128, 128, 8
    $region29: #{tpu_custom_call.1} parent=1 // pred_fallthru
      _
    // Predicated region
    $region30: #{tpu_custom_call.1} parent=1 // pred_check
      _
    $region31: #{tpu_custom_call.1} parent=1 // pred_check_branch
      %187 = sbr.rel (0) target = $region33
    $region32: #{tpu_custom_call.1} parent=1 // pred_region
      %188 = dma.done [#allocation3], 256
    $region33: #{tpu_custom_call.1} parent=1 // pred_fallthru
      _
    %189 = vsyncpa [#allocation3], 1

</llo_original>
